<compile_context>
chip_gen: v5e
topology: v5e:2x2
jax: 0.10.0
libtpu: 0.0.40
codegen_flags: <defaults>
</compile_context>

<pallas_src>
import functools

import jax
import jax.numpy as jnp
from jax.experimental import pallas as pl
from jax.experimental.pallas import tpu as pltpu


def _hard_flat_kernel(idx_ref, pts_ref, bank_ref, sim_ref, loss_ref,
                      topk_ref, pos_ref, *, n_background):
    n_id = pl.program_id(1)
    n_last = pl.num_programs(1) - 1

    # --- init running state at the first bank tile of each batch tile ---
    @pl.when(n_id == 0)
    def _init():
        topk_ref[...] = jnp.full_like(topk_ref, -jnp.inf)
        pos_ref[...] = jnp.zeros_like(pos_ref)

    # --- l2-normalize the points (f32 math, rsqrt on the EUP) ---
    x = pts_ref[...].astype(jnp.float32)                       # (tb, D)
    sq = jnp.sum(x * x, axis=1, keepdims=True)                 # (tb, 1)
    xn = x * jax.lax.rsqrt(sq)  # matches torch l2_normalize (no eps)

    # --- similarities tile: contract last dims directly (no bank.T) ---
    bank = bank_ref[...]                                       # (tn, D)
    sim = jax.lax.dot_general(
        xn.astype(bank.dtype), bank,
        dimension_numbers=(((1,), (1,)), ((), ())),
        preferred_element_type=jnp.float32,
    )                                                          # (tb, tn) f32
    sim_ref[...] = sim.astype(sim_ref.dtype)

    # --- positive similarity gather (lane-iota mask, global column offset) ---
    tile_n = sim.shape[1]
    lane = jax.lax.broadcasted_iota(jnp.int32, sim.shape, 1) + n_id * tile_n
    pos_hit = lane == idx_ref[...]                             # (tb, tn)
    pos_ref[...] += jnp.sum(jnp.where(pos_hit, sim, 0.0), axis=1, keepdims=True)

    # --- merge running top-k with this tile (k iterative max-extractions) ---
    work = jnp.concatenate([topk_ref[...], sim], axis=1)       # (tb, kpad+tn)
    ci = jax.lax.broadcasted_iota(jnp.int32, work.shape, 1)
    kpad_iota = jax.lax.broadcasted_iota(jnp.int32, topk_ref.shape, 1)
    new_topk = jnp.full(topk_ref.shape, -jnp.inf, dtype=jnp.float32)
    tk_sum = jnp.zeros((work.shape[0], 1), dtype=jnp.float32)
    big = jnp.int32(2 ** 30)
    for j in range(n_background):                              # n_background is small/static
        m = jnp.max(work, axis=1, keepdims=True)               # (tb, 1)
        # mask out exactly one occurrence of the max (handles ties like topk)
        first = jnp.min(jnp.where(work == m, ci, big), axis=1, keepdims=True)
        work = jnp.where(ci == first, -jnp.inf, work)
        new_topk = jnp.where(kpad_iota == j, m, new_topk)
        tk_sum = tk_sum + m
    topk_ref[...] = new_topk

    # --- finalize per-row loss terms at the last bank tile ---
    @pl.when(n_id == n_last)
    def _fin():
        loss_ref[...] = -pos_ref[...] + tk_sum * (1.0 / float(n_background))


def _pick_tile(total, candidates):
    for c in candidates:
        if total % c == 0:
            return c
    return total


def hard_flat_loss(points, point_indices, memory_bank, n_background,
                   *, tile_b=None, tile_n=None):
    """points: (B, D); point_indices: (B,) int; memory_bank: (N, D).

    Returns (loss_scalar, similarities[B, N]) matching HardFlatLoss.forward.
    """
    B, D = points.shape
    N, Db = memory_bank.shape
    assert D == Db, "feature dims of points and memory_bank must match"
    assert 1 <= n_background <= N, "n_background must be in [1, N]"

    if tile_b is None:
        tile_b = _pick_tile(B, (256, 128, 64, 32, 16, 8))
    if tile_n is None:
        tile_n = _pick_tile(N, (512, 256, 128))
    if B % tile_b:
        tile_b = B
    if N % tile_n:
        tile_n = N

    idx2d = point_indices.astype(jnp.int32).reshape(B, 1)
    kpad = max(128, ((n_background + 127) // 128) * 128)   # lane-aligned top-k buffer

    grid = (B // tile_b, N // tile_n)
    kern = functools.partial(_hard_flat_kernel, n_background=n_background)

    sim, loss_terms = pl.pallas_call(
        kern,
        out_shape=(
            jax.ShapeDtypeStruct((B, N), points.dtype),      # similarities
            jax.ShapeDtypeStruct((B, 1), jnp.float32),       # per-row loss terms
        ),
        grid=grid,
        in_specs=[
            pl.BlockSpec((tile_b, 1), lambda b, n: (b, 0)),  # point indices
            pl.BlockSpec((tile_b, D), lambda b, n: (b, 0)),  # points
            pl.BlockSpec((tile_n, D), lambda b, n: (n, 0)),  # memory bank (streamed)
        ],
        out_specs=(
            pl.BlockSpec((tile_b, tile_n), lambda b, n: (b, n)),
            pl.BlockSpec((tile_b, 1), lambda b, n: (b, 0)),
        ),
        scratch_shapes=[
            pltpu.VMEM((tile_b, kpad), jnp.float32),         # running top-k values
            pltpu.VMEM((tile_b, 1), jnp.float32),            # running positive sim
        ],
        compiler_params=pltpu.CompilerParams(
            dimension_semantics=("parallel", "arbitrary")),
    )(idx2d, points, memory_bank)

    # Final batch mean is a trivial B-length reduction; kept outside the kernel
    # so the batch grid axis can remain "parallel".
    loss = jnp.mean(loss_terms)
    return loss, sim


def hard_flat_loss_ref(points, point_indices, memory_bank, n_background):
    xn = points / jnp.sqrt(jnp.sum(points ** 2, axis=1, keepdims=True))
    sim = xn @ memory_bank.T
    pos = sim[jnp.arange(points.shape[0]), point_indices]
    topk_vals, _ = jax.lax.top_k(sim, n_background)
    loss = jnp.mean(-pos + topk_vals.sum(axis=1) / float(n_background))
    return loss, sim


if __name__ == "__main__":
    key = jax.random.PRNGKey(0)
    k1, k2, k3, k4, k5, k6 = jax.random.split(key, 6)

    # Test 1: multi-tile streaming over the memory bank (3 bank tiles of 128).
    B, D, N, K = 8, 32, 384, 5
    points = jax.random.normal(k1, (B, D), dtype=jnp.float32)
    memory_bank = jax.random.normal(k2, (N, D), dtype=jnp.float32)
    point_indices = jax.random.randint(k3, (B,), 0, N, dtype=jnp.int32)

    loss, sim = hard_flat_loss(points, point_indices, memory_bank, K, tile_n=128)
    jax.block_until_ready((loss, sim))
    loss_r, sim_r = hard_flat_loss_ref(points, point_indices, memory_bank, K)
    assert jnp.allclose(sim, sim_r, atol=1e-4, rtol=1e-4), "similarities mismatch (1)"
    assert jnp.allclose(loss, loss_r, atol=1e-4, rtol=1e-4), "loss mismatch (1)"

    # Test 2: single-tile path with auto tile selection and a different k.
    B2, D2, N2, K2 = 16, 64, 256, 3
    p2 = jax.random.normal(k4, (B2, D2), dtype=jnp.float32)
    bank2 = jax.random.normal(k5, (N2, D2), dtype=jnp.float32)
    idx2 = jax.random.randint(k6, (B2,), 0, N2, dtype=jnp.int32)

    l2, s2 = hard_flat_loss(p2, idx2, bank2, K2)
    jax.block_until_ready((l2, s2))
    l2r, s2r = hard_flat_loss_ref(p2, idx2, bank2, K2)
    assert jnp.allclose(s2, s2r, atol=1e-4, rtol=1e-4), "similarities mismatch (2)"
    assert jnp.allclose(l2, l2r, atol=1e-4, rtol=1e-4), "loss mismatch (2)"

    print("KERNEL_OK")
</pallas_src>

<mosaic_0001>
module attributes {stable_mosaic.version = 11 : i64} {
  func.func @_hard_flat_kernel(%arg0: i32, %arg1: i32, %arg2: memref<8x1xi32, #tpu.memory_space<vmem>>, %arg3: memref<8x32xf32, #tpu.memory_space<vmem>>, %arg4: memref<128x32xf32, #tpu.memory_space<vmem>>, %arg5: memref<8x128xf32, #tpu.memory_space<vmem>>, %arg6: memref<8x1xf32, #tpu.memory_space<vmem>>, %arg7: memref<8x128xf32, #tpu.memory_space<vmem>>, %arg8: memref<8x1xf32, #tpu.memory_space<vmem>>) attributes {dimension_semantics = [#tpu.dimension_semantics<parallel>, #tpu.dimension_semantics<arbitrary>], iteration_bounds = array<i64: 1, 3>, scalar_prefetch = 0 : i64, scratch_operands = 2 : i64, tpu.core_type = #tpu.core_type<tc>, window_params = [{transform_indices = @transform_0, window_bounds = array<i64: 8, 1>}, {transform_indices = @transform_1, window_bounds = array<i64: 8, 32>}, {transform_indices = @transform_2, window_bounds = array<i64: 128, 32>}, {transform_indices = @transform_3, window_bounds = array<i64: 8, 128>}, {transform_indices = @transform_4, window_bounds = array<i64: 8, 1>}]} {
    %c0_i32 = arith.constant 0 : i32
    %0 = arith.cmpi eq, %arg1, %c0_i32 : i32
    %1 = arith.extui %0 : i1 to i32
    %c0_i32_0 = arith.constant 0 : i32
    %2 = arith.cmpi ne, %1, %c0_i32_0 : i32
    scf.if %2 {
      %cst_40 = arith.constant 0xFF800000 : f32
      %117 = vector.broadcast %cst_40 : f32 to vector<8x128xf32>
      %c0_41 = arith.constant 0 : index
      %c0_42 = arith.constant 0 : index
      %118 = vector.load %arg7[%c0_41, %c0_42] : memref<8x128xf32, #tpu.memory_space<vmem>>, vector<8x128xf32>
      tpu.vector_store %arg7[%c0_41, %c0_42], %117 {strides = array<i32>} : memref<8x128xf32, #tpu.memory_space<vmem>>, vector<8x128xf32>,
      %cst_43 = arith.constant 0.000000e+00 : f32
      %119 = vector.broadcast %cst_43 : f32 to vector<8x1xf32>
      %c0_44 = arith.constant 0 : index
      %c0_45 = arith.constant 0 : index
      %120 = vector.load %arg8[%c0_44, %c0_45] : memref<8x1xf32, #tpu.memory_space<vmem>>, vector<8x1xf32>
      tpu.vector_store %arg8[%c0_44, %c0_45], %119 {strides = array<i32>} : memref<8x1xf32, #tpu.memory_space<vmem>>, vector<8x1xf32>,
    } else {
    }
    %c0 = arith.constant 0 : index
    %c0_1 = arith.constant 0 : index
    %3 = vector.load %arg3[%c0, %c0_1] : memref<8x32xf32, #tpu.memory_space<vmem>>, vector<8x32xf32>
    %4 = arith.mulf %3, %3 : vector<8x32xf32>
    %cst = arith.constant dense<0.000000e+00> : vector<8xf32>
    %5 = vector.multi_reduction <add>, %4, %cst [1] : vector<8x32xf32> to vector<8xf32>
    %6 = vector.shape_cast %5 : vector<8xf32> to vector<8x1xf32>
    %7 = math.rsqrt %6 : vector<8x1xf32>
    %8 = vector.broadcast %7 : vector<8x1xf32> to vector<8x32xf32>
    %9 = arith.mulf %3, %8 : vector<8x32xf32>
    %c0_2 = arith.constant 0 : index
    %c0_3 = arith.constant 0 : index
    %10 = vector.load %arg4[%c0_2, %c0_3] : memref<128x32xf32, #tpu.memory_space<vmem>>, vector<128x32xf32>
    %cst_4 = arith.constant dense<0.000000e+00> : vector<8x128xf32>
    %11 = tpu.matmul %9, %10, %cst_4 {dimension_numbers = #tpu.dot_dimension_numbers<[1], [1], [0], [0], [0, 0, 1, 0], [], []>} : vector<8x32xf32>, vector<128x32xf32>, vector<8x128xf32> -> vector<8x128xf32>
    %c0_5 = arith.constant 0 : index
    %c0_6 = arith.constant 0 : index
    %12 = vector.load %arg5[%c0_5, %c0_6] : memref<8x128xf32, #tpu.memory_space<vmem>>, vector<8x128xf32>
    tpu.vector_store %arg5[%c0_5, %c0_6], %11 {strides = array<i32>} : memref<8x128xf32, #tpu.memory_space<vmem>>, vector<8x128xf32>,
    %13 = tpu.iota {dimensions = array<i32: 1>} : vector<8x128xi32>
    %c128_i32 = arith.constant 128 : i32
    %14 = arith.muli %arg1, %c128_i32 : i32
    %15 = vector.broadcast %14 : i32 to vector<8x128xi32>
    %16 = arith.addi %13, %15 : vector<8x128xi32>
    %c0_7 = arith.constant 0 : index
    %c0_8 = arith.constant 0 : index
    %17 = vector.load %arg2[%c0_7, %c0_8] : memref<8x1xi32, #tpu.memory_space<vmem>>, vector<8x1xi32>
    %18 = vector.broadcast %17 : vector<8x1xi32> to vector<8x128xi32>
    %19 = arith.cmpi eq, %16, %18 : vector<8x128xi32>
    %c0_9 = arith.constant 0 : index
    %c0_10 = arith.constant 0 : index
    %20 = vector.load %arg8[%c0_9, %c0_10] : memref<8x1xf32, #tpu.memory_space<vmem>>, vector<8x1xf32>
    %cst_11 = arith.constant 0.000000e+00 : f32
    %21 = vector.broadcast %cst_11 : f32 to vector<8x128xf32>
    %22 = arith.select %19, %11, %21 : vector<8x128xi1>, vector<8x128xf32>
    %cst_12 = arith.constant dense<0.000000e+00> : vector<8xf32>
    %23 = vector.multi_reduction <add>, %22, %cst_12 [1] : vector<8x128xf32> to vector<8xf32>
    %24 = vector.shape_cast %23 : vector<8xf32> to vector<8x1xf32>
    %25 = arith.addf %20, %24 : vector<8x1xf32>
    %c0_13 = arith.constant 0 : index
    %c0_14 = arith.constant 0 : index
    %26 = vector.load %arg8[%c0_13, %c0_14] : memref<8x1xf32, #tpu.memory_space<vmem>>, vector<8x1xf32>
    tpu.vector_store %arg8[%c0_13, %c0_14], %25 {strides = array<i32>} : memref<8x1xf32, #tpu.memory_space<vmem>>, vector<8x1xf32>,
    %c0_15 = arith.constant 0 : index
    %c0_16 = arith.constant 0 : index
    %27 = vector.load %arg7[%c0_15, %c0_16] : memref<8x128xf32, #tpu.memory_space<vmem>>, vector<8x128xf32>
    %28 = tpu.concatenate %27, %11 in 1 : vector<8x128xf32>, vector<8x128xf32> -> vector<8x256xf32>
    %29 = tpu.iota {dimensions = array<i32: 1>} : vector<8x256xi32>
    %30 = tpu.iota {dimensions = array<i32: 1>} : vector<8x128xi32>
    %cst_17 = arith.constant 0xFF800000 : f32
    %31 = vector.broadcast %cst_17 : f32 to vector<8x128xf32>
    %cst_18 = arith.constant 0.000000e+00 : f32
    %32 = vector.broadcast %cst_18 : f32 to vector<8x1xf32>
    %cst_19 = arith.constant dense<0xFF800000> : vector<8xf32>
    %33 = vector.multi_reduction <maximumf>, %28, %cst_19 [1] : vector<8x256xf32> to vector<8xf32>
    %34 = vector.shape_cast %33 : vector<8xf32> to vector<8x1xf32>
    %35 = vector.broadcast %34 : vector<8x1xf32> to vector<8x256xf32>
    %36 = arith.cmpf oeq, %28, %35 : vector<8x256xf32>
    %c1073741824_i32 = arith.constant 1073741824 : i32
    %37 = vector.broadcast %c1073741824_i32 : i32 to vector<8x256xi32>
    %38 = arith.select %36, %29, %37 : vector<8x256xi1>, vector<8x256xi32>
    %cst_20 = arith.constant dense<2147483647> : vector<8xi32>
    %39 = vector.multi_reduction <minsi>, %38, %cst_20 [1] : vector<8x256xi32> to vector<8xi32>
    %40 = vector.shape_cast %39 : vector<8xi32> to vector<8x1xi32>
    %41 = vector.broadcast %40 : vector<8x1xi32> to vector<8x256xi32>
    %42 = arith.cmpi eq, %29, %41 : vector<8x256xi32>
    %cst_21 = arith.constant 0xFF800000 : f32
    %43 = vector.broadcast %cst_21 : f32 to vector<8x256xf32>
    %44 = arith.select %42, %43, %28 : vector<8x256xi1>, vector<8x256xf32>
    %c0_i32_22 = arith.constant 0 : i32
    %45 = vector.broadcast %c0_i32_22 : i32 to vector<8x128xi32>
    %46 = arith.cmpi eq, %30, %45 : vector<8x128xi32>
    %47 = vector.shape_cast %34 : vector<8x1xf32> to vector<8x1xf32>
    %48 = vector.broadcast %47 : vector<8x1xf32> to vector<8x128xf32>
    %49 = arith.select %46, %48, %31 : vector<8x128xi1>, vector<8x128xf32>
    %50 = arith.addf %32, %34 : vector<8x1xf32>
    %cst_23 = arith.constant dense<0xFF800000> : vector<8xf32>
    %51 = vector.multi_reduction <maximumf>, %44, %cst_23 [1] : vector<8x256xf32> to vector<8xf32>
    %52 = vector.shape_cast %51 : vector<8xf32> to vector<8x1xf32>
    %53 = vector.broadcast %52 : vector<8x1xf32> to vector<8x256xf32>
    %54 = arith.cmpf oeq, %44, %53 : vector<8x256xf32>
    %c1073741824_i32_24 = arith.constant 1073741824 : i32
    %55 = vector.broadcast %c1073741824_i32_24 : i32 to vector<8x256xi32>
    %56 = arith.select %54, %29, %55 : vector<8x256xi1>, vector<8x256xi32>
    %cst_25 = arith.constant dense<2147483647> : vector<8xi32>
    %57 = vector.multi_reduction <minsi>, %56, %cst_25 [1] : vector<8x256xi32> to vector<8xi32>
    %58 = vector.shape_cast %57 : vector<8xi32> to vector<8x1xi32>
    %59 = vector.broadcast %58 : vector<8x1xi32> to vector<8x256xi32>
    %60 = arith.cmpi eq, %29, %59 : vector<8x256xi32>
    %cst_26 = arith.constant 0xFF800000 : f32
    %61 = vector.broadcast %cst_26 : f32 to vector<8x256xf32>
    %62 = arith.select %60, %61, %44 : vector<8x256xi1>, vector<8x256xf32>
    %c1_i32 = arith.constant 1 : i32
    %63 = vector.broadcast %c1_i32 : i32 to vector<8x128xi32>
    %64 = arith.cmpi eq, %30, %63 : vector<8x128xi32>
    %65 = vector.shape_cast %52 : vector<8x1xf32> to vector<8x1xf32>
    %66 = vector.broadcast %65 : vector<8x1xf32> to vector<8x128xf32>
    %67 = arith.select %64, %66, %49 : vector<8x128xi1>, vector<8x128xf32>
    %68 = arith.addf %50, %52 : vector<8x1xf32>
    %cst_27 = arith.constant dense<0xFF800000> : vector<8xf32>
    %69 = vector.multi_reduction <maximumf>, %62, %cst_27 [1] : vector<8x256xf32> to vector<8xf32>
    %70 = vector.shape_cast %69 : vector<8xf32> to vector<8x1xf32>
    %71 = vector.broadcast %70 : vector<8x1xf32> to vector<8x256xf32>
    %72 = arith.cmpf oeq, %62, %71 : vector<8x256xf32>
    %c1073741824_i32_28 = arith.constant 1073741824 : i32
    %73 = vector.broadcast %c1073741824_i32_28 : i32 to vector<8x256xi32>
    %74 = arith.select %72, %29, %73 : vector<8x256xi1>, vector<8x256xi32>
    %cst_29 = arith.constant dense<2147483647> : vector<8xi32>
    %75 = vector.multi_reduction <minsi>, %74, %cst_29 [1] : vector<8x256xi32> to vector<8xi32>
    %76 = vector.shape_cast %75 : vector<8xi32> to vector<8x1xi32>
    %77 = vector.broadcast %76 : vector<8x1xi32> to vector<8x256xi32>
    %78 = arith.cmpi eq, %29, %77 : vector<8x256xi32>
    %cst_30 = arith.constant 0xFF800000 : f32
    %79 = vector.broadcast %cst_30 : f32 to vector<8x256xf32>
    %80 = arith.select %78, %79, %62 : vector<8x256xi1>, vector<8x256xf32>
    %c2_i32 = arith.constant 2 : i32
    %81 = vector.broadcast %c2_i32 : i32 to vector<8x128xi32>
    %82 = arith.cmpi eq, %30, %81 : vector<8x128xi32>
    %83 = vector.shape_cast %70 : vector<8x1xf32> to vector<8x1xf32>
    %84 = vector.broadcast %83 : vector<8x1xf32> to vector<8x128xf32>
    %85 = arith.select %82, %84, %67 : vector<8x128xi1>, vector<8x128xf32>
    %86 = arith.addf %68, %70 : vector<8x1xf32>
    %cst_31 = arith.constant dense<0xFF800000> : vector<8xf32>
    %87 = vector.multi_reduction <maximumf>, %80, %cst_31 [1] : vector<8x256xf32> to vector<8xf32>
    %88 = vector.shape_cast %87 : vector<8xf32> to vector<8x1xf32>
    %89 = vector.broadcast %88 : vector<8x1xf32> to vector<8x256xf32>
    %90 = arith.cmpf oeq, %80, %89 : vector<8x256xf32>
    %c1073741824_i32_32 = arith.constant 1073741824 : i32
    %91 = vector.broadcast %c1073741824_i32_32 : i32 to vector<8x256xi32>
    %92 = arith.select %90, %29, %91 : vector<8x256xi1>, vector<8x256xi32>
    %cst_33 = arith.constant dense<2147483647> : vector<8xi32>
    %93 = vector.multi_reduction <minsi>, %92, %cst_33 [1] : vector<8x256xi32> to vector<8xi32>
    %94 = vector.shape_cast %93 : vector<8xi32> to vector<8x1xi32>
    %95 = vector.broadcast %94 : vector<8x1xi32> to vector<8x256xi32>
    %96 = arith.cmpi eq, %29, %95 : vector<8x256xi32>
    %cst_34 = arith.constant 0xFF800000 : f32
    %97 = vector.broadcast %cst_34 : f32 to vector<8x256xf32>
    %98 = arith.select %96, %97, %80 : vector<8x256xi1>, vector<8x256xf32>
    %c3_i32 = arith.constant 3 : i32
    %99 = vector.broadcast %c3_i32 : i32 to vector<8x128xi32>
    %100 = arith.cmpi eq, %30, %99 : vector<8x128xi32>
    %101 = vector.shape_cast %88 : vector<8x1xf32> to vector<8x1xf32>
    %102 = vector.broadcast %101 : vector<8x1xf32> to vector<8x128xf32>
    %103 = arith.select %100, %102, %85 : vector<8x128xi1>, vector<8x128xf32>
    %104 = arith.addf %86, %88 : vector<8x1xf32>
    %cst_35 = arith.constant dense<0xFF800000> : vector<8xf32>
    %105 = vector.multi_reduction <maximumf>, %98, %cst_35 [1] : vector<8x256xf32> to vector<8xf32>
    %106 = vector.shape_cast %105 : vector<8xf32> to vector<8x1xf32>
    %c4_i32 = arith.constant 4 : i32
    %107 = vector.broadcast %c4_i32 : i32 to vector<8x128xi32>
    %108 = arith.cmpi eq, %30, %107 : vector<8x128xi32>
    %109 = vector.shape_cast %106 : vector<8x1xf32> to vector<8x1xf32>
    %110 = vector.broadcast %109 : vector<8x1xf32> to vector<8x128xf32>
    %111 = arith.select %108, %110, %103 : vector<8x128xi1>, vector<8x128xf32>
    %112 = arith.addf %104, %106 : vector<8x1xf32>
    %c0_36 = arith.constant 0 : index
    %c0_37 = arith.constant 0 : index
    %113 = vector.load %arg7[%c0_36, %c0_37] : memref<8x128xf32, #tpu.memory_space<vmem>>, vector<8x128xf32>
    tpu.vector_store %arg7[%c0_36, %c0_37], %111 {strides = array<i32>} : memref<8x128xf32, #tpu.memory_space<vmem>>, vector<8x128xf32>,
    %c2_i32_38 = arith.constant 2 : i32
    %114 = arith.cmpi eq, %arg1, %c2_i32_38 : i32
    %115 = arith.extui %114 : i1 to i32
    %c0_i32_39 = arith.constant 0 : i32
    %116 = arith.cmpi ne, %115, %c0_i32_39 : i32
    scf.if %116 {
      %c0_40 = arith.constant 0 : index
      %c0_41 = arith.constant 0 : index
      %117 = vector.load %arg8[%c0_40, %c0_41] : memref<8x1xf32, #tpu.memory_space<vmem>>, vector<8x1xf32>
      %cst_42 = arith.constant 0.000000e+00 : f32
      %118 = vector.broadcast %cst_42 : f32 to vector<8x1xf32>
      %119 = arith.subf %118, %117 : vector<8x1xf32>
      %cst_43 = arith.constant 2.000000e-01 : f32
      %120 = vector.broadcast %cst_43 : f32 to vector<8x1xf32>
      %121 = arith.mulf %112, %120 : vector<8x1xf32>
      %122 = arith.addf %119, %121 : vector<8x1xf32>
      %c0_44 = arith.constant 0 : index
      %c0_45 = arith.constant 0 : index
      %123 = vector.load %arg6[%c0_44, %c0_45] : memref<8x1xf32, #tpu.memory_space<vmem>>, vector<8x1xf32>
      tpu.vector_store %arg6[%c0_44, %c0_45], %122 {strides = array<i32>} : memref<8x1xf32, #tpu.memory_space<vmem>>, vector<8x1xf32>,
    } else {
    }
    return
  }
  func.func @transform_0(%arg0: i32, %arg1: i32) -> (i32, i32) {
    %c0_i32 = arith.constant 0 : i32
    %c0_i32_0 = arith.constant 0 : i32
    return %arg0, %c0_i32 : i32, i32
  }
  func.func @transform_1(%arg0: i32, %arg1: i32) -> (i32, i32) {
    %c0_i32 = arith.constant 0 : i32
    %c0_i32_0 = arith.constant 0 : i32
    return %arg0, %c0_i32 : i32, i32
  }
  func.func @transform_2(%arg0: i32, %arg1: i32) -> (i32, i32) {
    %c0_i32 = arith.constant 0 : i32
    %c0_i32_0 = arith.constant 0 : i32
    return %arg1, %c0_i32 : i32, i32
  }
  func.func @transform_3(%arg0: i32, %arg1: i32) -> (i32, i32) {
    %c0_i32 = arith.constant 0 : i32
    return %arg0, %arg1 : i32, i32
  }
  func.func @transform_4(%arg0: i32, %arg1: i32) -> (i32, i32) {
    %c0_i32 = arith.constant 0 : i32
    %c0_i32_0 = arith.constant 0 : i32
    return %arg0, %c0_i32 : i32, i32
  }
}

</mosaic_0001>

<llo_original>
// kernel: tpu_custom_call.1
$region0: #{tpu_custom_call.1}
  #allocation0 [shape = 'u32[]', space=smem, size = 0x4, offset = 0x4, fixed_abs, tag = 'smem constant byte address 0x4 - core index']
  #allocation1 [shape = 'u32[72,128]{1,0:T(1,128)}', space=vmem, size = 0x9000, scoped, tag = 'internal scratch']
  #allocation2 [shape = 'f32[8,128]{1,0:T(8,128)}', space=vmem, size = 0x1000, scoped, tag = 'scratch operand']
  #allocation3 [shape = 'f32[8,1]{1,0:T(8,128)}', space=vmem, size = 0x1000, scoped, tag = 'scratch operand']
  %s0 = inlined_call_operand.vmem [shape: s32[8,1], index: 0, kind: input, shape index: {}]
  %s1 = inlined_call_operand.vmem [shape: f32[8,32], index: 1, kind: input, shape index: {}]
  %s2 = inlined_call_operand.vmem [shape: f32[384,32], index: 2, kind: input, shape index: {}]
  %s3 = inlined_call_operand.hbm [shape: f32[8,384], index: 3, kind: output, shape index: {0}]
  %s4 = inlined_call_operand.vmem [shape: f32[8,1], index: 4, kind: output, shape index: {1}]
  %5 = xla_tuple %s3, %s4
  %s6 = sld [smem:[#allocation0]]
  $region61: #{tpu_custom_call.1} parent=0
    _
  %s8 = ssub.s32 1, %s6
  %s9 = scalar_select 0, %s8, %s6
  $region1: #{tpu_custom_call.1} parent=0
    #allocation4 [shape = 'u8[8192]{0}', space=vmem, size = 0x2000, scoped, tag = 'output window, operand 0']
    #allocation5 [shape = 's32[2]{0}', space=sflag, size = 0x8, scoped, tag = 'scoped memory for tpu_custom_call.1']
    %10 = vsyncpa [#allocation5], 0
    %s11 = scalar_lea.sflag [#allocation5], 1
    %12 = vsyncpa %s11, 0
    loop: start=0, step=1, limit=5
    $region2: #{tpu_custom_call.1} parent=1 // loop_pre_header
      _
    $region3: #{tpu_custom_call.1} parent=1 // loop_header
      %s14 = sphi 0, %s18
      %p15 = scmp.ge.s32.totalorder %s14, 5
      %s21 = sphi 0, %s33
      %s22 = sphi 0, %s29
      %s23 = sphi 0, %s21
      %s24 = sphi 0, %s22
      %s25 = sphi 0, %s23
      %s26 = sphi 0, %s24
      %s36 = sphi 0, %s38
      %s39 = sphi 0, %s36
      %s40 = sphi 0, %s39
      %s56 = sphi 0, %s40
      %s62 = sphi 0, %s64
      %s65 = sphi 0, %s62
      %s66 = sphi 0, %s65
      %s82 = sphi 0, %s66
      %s88 = sphi 0, %s90
      %s91 = sphi 0, %s88
      %s92 = sphi 0, %s91
      %s108 = sphi 0, %s92
      %s116 = sphi 0, %s118
      %s119 = sphi 0, %s116
      %s120 = sphi 0, %s119
      %s136 = sphi 0, %s120
      %s142 = sphi 0, %s144
      %s145 = sphi 0, %s142
      %s146 = sphi 0, %s145
      %s162 = sphi 0, %s146
    $region4: #{tpu_custom_call.1} parent=1 // loop_header_branch
      %17 = sbr.rel (%p15) target = $region8
    $region5: #{tpu_custom_call.1} parent=1 // loop_body
      %s19 = ssub.s32 %s14, 1
      %s20 = ssub.s32 %s14, 2
      %s27 = sadd.s32 1, %s22
      %p28 = scmp.ge.s32.totalorder %s27, 3
      %s29 = scalar_select %p28, 0, %s27
      %s30 = sadd.s32 1, %s21
      %s31 = scalar_select %p28, %s30, %s21
      %p32 = scmp.ge.s32.totalorder %s31, 1
      %s33 = scalar_select %p32, 0, %s31
      %s34 = ssub.s32 %s21, %s33
      %p35 = scmp.eq.s32.totalorder %s34, 0
      %s37 = sadd.s32 %s36, 1
      %s38 = scalar_select %p35, %s36, %s37
      %p41 = pneg %p35
      %p42 = scmp.eq.s32.totalorder %s14, 2
      %p43 = por %p41, %p42
      %p44 = scmp.ne.s32.totalorder %s36, %s39
      %p45 = scmp.eq.s32.totalorder %s14, 0
      %p46 = por %p44, %p45
      %p47 = scmp.ne.s32.totalorder %s36, %s39
      %p48 = scmp.eq.s32.totalorder %s19, 2
      %p49 = por %p47, %p48
      %p50 = scmp.ne.s32.totalorder %s39, %s40
      %p51 = scmp.eq.s32.totalorder %s19, 0
      %p52 = por %p50, %p51
      %p53 = scmp.ne.s32.totalorder %s39, %s40
      %p54 = scmp.eq.s32.totalorder %s20, 2
      %p55 = por %p53, %p54
      %p57 = scmp.ne.s32.totalorder %s40, %s56
      %p58 = scmp.eq.s32.totalorder %s20, 0
      %p59 = por %p57, %p58
      %s60 = ssub.s32 %s21, %s33
      %p61 = scmp.eq.s32.totalorder %s60, 0
      %s63 = sadd.s32 %s62, 1
      %s64 = scalar_select %p61, %s62, %s63
      %p67 = pneg %p61
      %p68 = scmp.eq.s32.totalorder %s14, 2
      %p69 = por %p67, %p68
      %p70 = scmp.ne.s32.totalorder %s62, %s65
      %p71 = scmp.eq.s32.totalorder %s14, 0
      %p72 = por %p70, %p71
      %p73 = scmp.ne.s32.totalorder %s62, %s65
      %p74 = scmp.eq.s32.totalorder %s19, 2
      %p75 = por %p73, %p74
      %p76 = scmp.ne.s32.totalorder %s65, %s66
      %p77 = scmp.eq.s32.totalorder %s19, 0
      %p78 = por %p76, %p77
      %p79 = scmp.ne.s32.totalorder %s65, %s66
      %p80 = scmp.eq.s32.totalorder %s20, 2
      %p81 = por %p79, %p80
      %p83 = scmp.ne.s32.totalorder %s66, %s82
      %p84 = scmp.eq.s32.totalorder %s20, 0
      %p85 = por %p83, %p84
      %s86 = ssub.s32 %s22, %s29
      %p87 = scmp.eq.s32.totalorder %s86, 0
      %s89 = sadd.s32 %s88, 1
      %s90 = scalar_select %p87, %s88, %s89
      %p93 = pneg %p87
      %p94 = scmp.eq.s32.totalorder %s14, 2
      %p95 = por %p93, %p94
      %p96 = scmp.ne.s32.totalorder %s88, %s91
      %p97 = scmp.eq.s32.totalorder %s14, 0
      %p98 = por %p96, %p97
      %p99 = scmp.ne.s32.totalorder %s88, %s91
      %p100 = scmp.eq.s32.totalorder %s19, 2
      %p101 = por %p99, %p100
      %p102 = scmp.ne.s32.totalorder %s91, %s92
      %p103 = scmp.eq.s32.totalorder %s19, 0
      %p104 = por %p102, %p103
      %p105 = scmp.ne.s32.totalorder %s91, %s92
      %p106 = scmp.eq.s32.totalorder %s20, 2
      %p107 = por %p105, %p106
      %p109 = scmp.ne.s32.totalorder %s92, %s108
      %p110 = scmp.eq.s32.totalorder %s20, 0
      %p111 = por %p109, %p110
      %s112 = ssub.s32 %s21, %s33
      %s113 = ssub.s32 %s22, %s29
      %s114 = sor.u32 %s112, %s113
      %p115 = scmp.eq.s32.totalorder %s114, 0
      %s117 = sadd.s32 %s116, 1
      %s118 = scalar_select %p115, %s116, %s117
      %p121 = pneg %p115
      %p122 = scmp.eq.s32.totalorder %s14, 2
      %p123 = por %p121, %p122
      %p124 = scmp.ne.s32.totalorder %s116, %s119
      %p125 = scmp.eq.s32.totalorder %s14, 0
      %p126 = por %p124, %p125
      %p127 = scmp.ne.s32.totalorder %s116, %s119
      %p128 = scmp.eq.s32.totalorder %s19, 2
      %p129 = por %p127, %p128
      %p130 = scmp.ne.s32.totalorder %s119, %s120
      %p131 = scmp.eq.s32.totalorder %s19, 0
      %p132 = por %p130, %p131
      %p133 = scmp.ne.s32.totalorder %s119, %s120
      %p134 = scmp.eq.s32.totalorder %s20, 2
      %p135 = por %p133, %p134
      %p137 = scmp.ne.s32.totalorder %s120, %s136
      %p138 = scmp.eq.s32.totalorder %s20, 0
      %p139 = por %p137, %p138
      %s140 = ssub.s32 %s21, %s33
      %p141 = scmp.eq.s32.totalorder %s140, 0
      %s143 = sadd.s32 %s142, 1
      %s144 = scalar_select %p141, %s142, %s143
      %p147 = pneg %p141
      %p148 = scmp.eq.s32.totalorder %s14, 2
      %p149 = por %p147, %p148
      %p150 = scmp.ne.s32.totalorder %s142, %s145
      %p151 = scmp.eq.s32.totalorder %s14, 0
      %p152 = por %p150, %p151
      %p153 = scmp.ne.s32.totalorder %s142, %s145
      %p154 = scmp.eq.s32.totalorder %s19, 2
      %p155 = por %p153, %p154
      %p156 = scmp.ne.s32.totalorder %s145, %s146
      %p157 = scmp.eq.s32.totalorder %s19, 0
      %p158 = por %p156, %p157
      %p159 = scmp.ne.s32.totalorder %s145, %s146
      %p160 = scmp.eq.s32.totalorder %s20, 2
      %p161 = por %p159, %p160
      %p163 = scmp.ne.s32.totalorder %s146, %s162
      %p164 = scmp.eq.s32.totalorder %s20, 0
      %p165 = por %p163, %p164
      %p166 = scmp.le.s32.totalorder 1, %s14
      %p167 = scmp.lt.s32.totalorder %s14, 4
      %p168 = pnand %p166, %p167
      %p169 = pneg %p168
      // Predicated region
      $region9: #{tpu_custom_call.1} parent=5 // pred_check
        _
      $region10: #{tpu_custom_call.1} parent=5 // pred_check_branch
        %171 = sbr.rel (%p168) target = $region12
      $region11: #{tpu_custom_call.1} parent=5 // pred_region
        %s172 = ssub.s32 %s14, 1
        // Predicated region
        $region13: #{tpu_custom_call.1} parent=11 // pred_check
          %p173 = pneg %p52
        $region14: #{tpu_custom_call.1} parent=11 // pred_check_branch
          %175 = sbr.rel (%p173) target = $region16
        $region15: #{tpu_custom_call.1} parent=11 // pred_region
          %p176 = scmp.lt.s32.totalorder %s23, 0
          %s177 = scalar_select %p176, %s23, 0
          %s178 = smul.addr %s177, 8
          %s179 = scalar_lea.vmem %s0, %s178
        $region16: #{tpu_custom_call.1} parent=11 // pred_fallthru
          _
        // Predicated region
        $region17: #{tpu_custom_call.1} parent=11 // pred_check
          %p180 = pneg %p78
        $region18: #{tpu_custom_call.1} parent=11 // pred_check_branch
          %182 = sbr.rel (%p180) target = $region20
        $region19: #{tpu_custom_call.1} parent=11 // pred_region
          %p183 = scmp.lt.s32.totalorder %s23, 0
          %s184 = scalar_select %p183, %s23, 0
          %s185 = smul.addr %s184, 8
          %s186 = scalar_lea.vmem %s1, %s185
        $region20: #{tpu_custom_call.1} parent=11 // pred_fallthru
          _
      $region12: #{tpu_custom_call.1} parent=5 // pred_fallthru
        _
      %p187 = scmp.lt.s32.totalorder %s14, 3
      // Predicated region
      $region21: #{tpu_custom_call.1} parent=5 // pred_check
        %p188 = pneg %p187
      $region22: #{tpu_custom_call.1} parent=5 // pred_check_branch
        %190 = sbr.rel (%p188) target = $region24
      $region23: #{tpu_custom_call.1} parent=5 // pred_region
        // Predicated region
        $region25: #{tpu_custom_call.1} parent=23 // pred_check
          %p191 = pneg %p98
        $region26: #{tpu_custom_call.1} parent=23 // pred_check_branch
          %193 = sbr.rel (%p191) target = $region28
        $region27: #{tpu_custom_call.1} parent=23 // pred_region
          %s194 = smul.u32 16, %s22
          %p195 = scmp.lt.s32.totalorder %s194, 47
          %s196 = scalar_select %p195, %s194, 47
          %s197 = smul.addr %s196, 8
          %s198 = scalar_lea.vmem %s2, %s197
          %s199 = smul.u32 16, %s22
        $region28: #{tpu_custom_call.1} parent=23 // pred_fallthru
          _
      $region24: #{tpu_custom_call.1} parent=5 // pred_fallthru
        _
      %p200 = scmp.le.s32.totalorder 1, %s14
      %p201 = scmp.lt.s32.totalorder %s14, 4
      %p202 = pnand %p200, %p201
      %p203 = pneg %p202
      // Predicated region
      $region29: #{tpu_custom_call.1} parent=5 // pred_check
        _
      $region30: #{tpu_custom_call.1} parent=5 // pred_check_branch
        %205 = sbr.rel (%p202) target = $region32
      $region31: #{tpu_custom_call.1} parent=5 // pred_region
        %s206 = ssub.s32 %s14, 1
        %p207 = scmp.lt.s32.totalorder %s23, 0
        %s208 = scalar_select %p207, %s23, 0
        %s209 = smul.addr %s208, 8
        %s210 = scalar_lea.vmem %s0, %s209
        %p211 = pneg %p52
        %p212 = pneg %p49
        %p213 = scmp.lt.s32.totalorder %s23, 0
        %s214 = scalar_select %p213, %s23, 0
        %s215 = smul.addr %s214, 8
        %s216 = scalar_lea.vmem %s1, %s215
        %p217 = pneg %p78
        %p218 = pneg %p75
        %s219 = smul.u32 16, %s24
        %p220 = scmp.lt.s32.totalorder %s219, 47
        %s221 = scalar_select %p220, %s219, 47
        %s222 = smul.addr %s221, 8
        %s223 = scalar_lea.vmem %s2, %s222
        %p224 = pneg %p104
        %p225 = pneg %p101
        %p226 = pneg %p132
        %p227 = pneg %p129
        %s228 = sand.u32 %s119, 1
        %s229 = scalar_lea.sflag [#allocation5], %s228
        %s230 = sand.u32 %s119, 1
        %s231 = smul.addr %s230, 8
        %s232 = scalar_lea.vmem [#allocation4], %s231
        %p233 = pneg %p158
        %p234 = pneg %p155
        %p235 = scmp.lt.s32.totalorder %s23, 0
        %s236 = scalar_select %p235, %s23, 0
        %s237 = smul.addr %s236, 8
        %s238 = scalar_lea.vmem %s4, %s237
        %p239 = scmp.lt.s32.totalorder %s23, 0
        %s240 = scalar_select %p239, %s23, 0
        %s241 = smul.addr %s240, 8
        %s242 = scalar_lea.vmem %s0, %s241
        %p243 = scmp.lt.s32.totalorder %s23, 0
        %s244 = scalar_select %p243, %s23, 0
        %s245 = smul.addr %s244, 8
        %s246 = scalar_lea.vmem %s1, %s245
        %s247 = smul.u32 16, %s24
        %p248 = scmp.lt.s32.totalorder %s247, 47
        %s249 = scalar_select %p248, %s247, 47
        %s250 = smul.addr %s249, 8
        %s251 = scalar_lea.vmem %s2, %s250
        %s252 = smul.u32 16, %s24
        %p253 = scmp.lt.s32.totalorder %s23, 0
        %s254 = scalar_select %p253, %s23, 0
        %s255 = smul.addr %s254, 8
        %s256 = scalar_lea.vmem %s4, %s255
        %p257 = scmp.eq.s32.totalorder %s24, 0
        // Predicated region
        $region33: #{tpu_custom_call.1} parent=31 // pred_check
          %p258 = pneg %p257
        $region34: #{tpu_custom_call.1} parent=31 // pred_check_branch
          %260 = sbr.rel (%p258) target = $region36
        $region35: #{tpu_custom_call.1} parent=31 // pred_region
          %261 = vst [vmem:[#allocation2] sm:$0xff] -inf
          %vm262 = vcmask 7168
          %263 = vst.msk [vmem:[#allocation3] sm:$0xff] %vm262, 0.0
        $region36: #{tpu_custom_call.1} parent=31 // pred_fallthru
          _
        %v264 = vld [vmem:[%s246] sm:$0xff]
        %v265 = vmul.f32 %v264, %v264
        %vm266 = vcmask 261120
        %v267 = vsel %vm266, %v265, 0.0
        %268 = vadd.xlane.f32.xlu0 %v267
        %v269 = vpop.xlane.xlu0 %268
        %v270 = vrsqrt.pop %v269
        %v271 = vmul.f32 %v270, %v269
        %v272 = vmul.f32 %v271, %v270
        %v273 = vmul.f32 0.5, %v272
        %v274 = vsub.f32 1.5, %v273
        %v275 = vmul.f32 %v270, %v274
        %vm276 = vweird.f32 %v269
        %vm277 = vweird.f32 %v270
        %vm278 = vmor %vm276, %vm277
        %v279 = vsel %vm278, %v270, %v275
        %v280 = vmul.f32 %v264, %v279
        %v281 = vld [vmem:[%s251] sm:$0xff]
        %v282 = vld [vmem:[%s251 + $0x8] sm:$0xff]
        %v283 = vld [vmem:[%s251 + $0x10] sm:$0xff]
        %v284 = vld [vmem:[%s251 + $0x18] sm:$0xff]
        %v285 = vld [vmem:[%s251 + $0x20] sm:$0xff]
        %v286 = vld [vmem:[%s251 + $0x28] sm:$0xff]
        %v287 = vld [vmem:[%s251 + $0x30] sm:$0xff]
        %v288 = vld [vmem:[%s251 + $0x38] sm:$0xff]
        %v289 = vld [vmem:[%s251 + $0x40] sm:$0xff]
        %v290 = vld [vmem:[%s251 + $0x48] sm:$0xff]
        %v291 = vld [vmem:[%s251 + $0x50] sm:$0xff]
        %v292 = vld [vmem:[%s251 + $0x58] sm:$0xff]
        %v293 = vld [vmem:[%s251 + $0x60] sm:$0xff]
        %v294 = vld [vmem:[%s251 + $0x68] sm:$0xff]
        %v295 = vld [vmem:[%s251 + $0x70] sm:$0xff]
        %v296 = vld [vmem:[%s251 + $0x78] sm:$0xff]
        %v298 = vsel %vm266, %v280, 0
        %v301 = vsel %vm266, %v281, 0
        %v304 = vsel %vm266, %v282, 0
        %v307 = vsel %vm266, %v283, 0
        %v310 = vsel %vm266, %v284, 0
        %v313 = vsel %vm266, %v285, 0
        %v316 = vsel %vm266, %v286, 0
        %v319 = vsel %vm266, %v287, 0
        %v322 = vsel %vm266, %v288, 0
        %v325 = vsel %vm266, %v289, 0
        %v328 = vsel %vm266, %v290, 0
        %v331 = vsel %vm266, %v291, 0
        %v334 = vsel %vm266, %v292, 0
        %v337 = vsel %vm266, %v293, 0
        %v340 = vsel %vm266, %v294, 0
        %v343 = vsel %vm266, %v295, 0
        %v346 = vsel %vm266, %v296, 0
        %348 = vmatpush.xpose.msra.mxu0 %v346
        %349 = vmatpush.xpose.msra.mxu0 %v343
        %350 = vmatpush.xpose.msra.mxu0 %v340
        %351 = vmatpush.xpose.msra.mxu0 %v337
        %352 = vmatpush.xpose.msra.mxu0 %v334
        %353 = vmatpush.xpose.msra.mxu0 %v331
        %354 = vmatpush.xpose.msra.mxu0 %v328
        %355 = vmatpush.xpose.msra.mxu0 %v325
        %356 = vmatpush.xpose.msra.mxu0 %v322
        %357 = vmatpush.xpose.msra.mxu0 %v319
        %358 = vmatpush.xpose.msra.mxu0 %v316
        %359 = vmatpush.xpose.msra.mxu0 %v313
        %360 = vmatpush.xpose.msra.mxu0 %v310
        %361 = vmatpush.xpose.msra.mxu0 %v307
        %362 = vmatpush.xpose.msra.mxu0 %v304
        %363 = vmatpush.xpose.msra.mxu0 %v301
        %364 = vmatmul.f32.gmra.mxu0 %v298
        %v365 = vpop.f32.mrf.mxu0
        %v366 = vadd.f32 0.0, %v365
        %367 = vdwg.mxu0
        %368 = vst [vmem:[%s232] sm:$0xff] %v366
        %v369 = vlaneseq
        %v370 = vand.u32 %v369, 127
        %s371 = smul.u32 %s24, 128
        %v372 = vstv %s371
        %v373 = vadd.s32 %v370, %v372
        %v374 = vld [vmem:[%s242] sm:$0xff]
        %375 = vset.pattern.permute.xlu0 0
        %376 = vperm.xlu0 %375, %v374
        %v377 = vpop.permute.xlu0 %376
        %vm378 = vcmp.eq.s32.totalorder %v373, %v377
        %v379 = vld [vmem:[#allocation3] sm:$0xff]
        %v380 = vsel %vm378, %v366, 0.0
        %381 = vadd.xlane.f32.xlu0 %v380
        %v382 = vpop.xlane.xlu0 %381
        %v383 = vadd.f32 %v379, %v382
        %vm384 = vcmask 7168
        %385 = vst.msk [vmem:[#allocation3] sm:$0xff] %vm384, %v383
        %v386 = vld [vmem:[#allocation2] sm:$0xff]
        %v387 = vadd.s32 %v370, 128
        %v388 = vmax.f32 %v386, %v366
        %389 = vmax.xlane.f32.xlu0 %v388
        %v390 = vpop.xlane.xlu0 %389
        %vm391 = vcmp.eq.f32.partialorder %v386, %v390
        %vm392 = vcmp.eq.f32.partialorder %v366, %v390
        %v393 = vsel %vm391, %v370, 1073741824
        %v394 = vsel %vm392, %v387, 1073741824
        %vm395 = vcmp.lt.s32.totalorder %v393, %v394
        %v396 = vsel %vm395, %v393, %v394
        %v397 = vand.u32 %v396, 65535
        %v398 = vshra.s32 %v396, 16
        %v399 = vcvt.s32.f32 %v397
        %v400 = vcvt.s32.f32 %v398
        %401 = vmin.xlane.f32.xlu0 %v400
        %v402 = vpop.xlane.xlu0 %401
        %vm403 = vcmp.eq.f32.partialorder %v400, %v402
        %v404 = vsel %vm403, %v399, inf
        %405 = vmin.xlane.f32.xlu0 %v404
        %v406 = vpop.xlane.xlu0 %405
        %v407 = vcvt.f32.s32 %v406
        %v408 = vcvt.f32.s32 %v402
        %v409 = vshll.u32 %v408, 16
        %v410 = vadd.s32 %v409, %v407
        %vm411 = vcmp.eq.s32.totalorder %v370, %v410
        %vm412 = vcmp.eq.s32.totalorder %v387, %v410
        %v413 = vsel %vm411, -inf, %v386
        %v414 = vsel %vm412, -inf, %v366
        %vm415 = vcmp.eq.s32.totalorder %v370, 0
        %v416 = vsel %vm415, %v390, -inf
        %v417 = vadd.f32 %v390, 0.0
        %v418 = vmax.f32 %v413, %v414
        %419 = vmax.xlane.f32.xlu0 %v418
        %v420 = vpop.xlane.xlu0 %419
        %vm421 = vcmp.eq.f32.partialorder %v413, %v420
        %vm422 = vcmp.eq.f32.partialorder %v414, %v420
        %v423 = vsel %vm421, %v370, 1073741824
        %v424 = vsel %vm422, %v387, 1073741824
        %vm425 = vcmp.lt.s32.totalorder %v423, %v424
        %v426 = vsel %vm425, %v423, %v424
        %v427 = vand.u32 %v426, 65535
        %v428 = vshra.s32 %v426, 16
        %v429 = vcvt.s32.f32 %v427
        %v430 = vcvt.s32.f32 %v428
        %431 = vmin.xlane.f32.xlu0 %v430
        %v432 = vpop.xlane.xlu0 %431
        %vm433 = vcmp.eq.f32.partialorder %v430, %v432
        %v434 = vsel %vm433, %v429, inf
        %435 = vmin.xlane.f32.xlu0 %v434
        %v436 = vpop.xlane.xlu0 %435
        %v437 = vcvt.f32.s32 %v436
        %v438 = vcvt.f32.s32 %v432
        %v439 = vshll.u32 %v438, 16
        %v440 = vadd.s32 %v439, %v437
        %vm441 = vcmp.eq.s32.totalorder %v370, %v440
        %vm442 = vcmp.eq.s32.totalorder %v387, %v440
        %v443 = vsel %vm441, -inf, %v413
        %v444 = vsel %vm442, -inf, %v414
        %vm445 = vcmp.eq.s32.totalorder %v370, 1
        %v446 = vsel %vm445, %v420, %v416
        %v447 = vadd.f32 %v417, %v420
        %v448 = vmax.f32 %v443, %v444
        %449 = vmax.xlane.f32.xlu0 %v448
        %v450 = vpop.xlane.xlu0 %449
        %vm451 = vcmp.eq.f32.partialorder %v443, %v450
        %vm452 = vcmp.eq.f32.partialorder %v444, %v450
        %v453 = vsel %vm451, %v370, 1073741824
        %v454 = vsel %vm452, %v387, 1073741824
        %vm455 = vcmp.lt.s32.totalorder %v453, %v454
        %v456 = vsel %vm455, %v453, %v454
        %v457 = vand.u32 %v456, 65535
        %v458 = vshra.s32 %v456, 16
        %v459 = vcvt.s32.f32 %v457
        %v460 = vcvt.s32.f32 %v458
        %461 = vmin.xlane.f32.xlu0 %v460
        %v462 = vpop.xlane.xlu0 %461
        %vm463 = vcmp.eq.f32.partialorder %v460, %v462
        %v464 = vsel %vm463, %v459, inf
        %465 = vmin.xlane.f32.xlu0 %v464
        %v466 = vpop.xlane.xlu0 %465
        %v467 = vcvt.f32.s32 %v466
        %v468 = vcvt.f32.s32 %v462
        %v469 = vshll.u32 %v468, 16
        %v470 = vadd.s32 %v469, %v467
        %vm471 = vcmp.eq.s32.totalorder %v370, %v470
        %vm472 = vcmp.eq.s32.totalorder %v387, %v470
        %v473 = vsel %vm471, -inf, %v443
        %v474 = vsel %vm472, -inf, %v444
        %vm475 = vcmp.eq.s32.totalorder %v370, 2
        %v476 = vsel %vm475, %v450, %v446
        %v477 = vadd.f32 %v447, %v450
        %v478 = vmax.f32 %v473, %v474
        %479 = vmax.xlane.f32.xlu0 %v478
        %v480 = vpop.xlane.xlu0 %479
        %vm481 = vcmp.eq.f32.partialorder %v473, %v480
        %vm482 = vcmp.eq.f32.partialorder %v474, %v480
        %v483 = vsel %vm481, %v370, 1073741824
        %v484 = vsel %vm482, %v387, 1073741824
        %vm485 = vcmp.lt.s32.totalorder %v483, %v484
        %v486 = vsel %vm485, %v483, %v484
        %v487 = vand.u32 %v486, 65535
        %v488 = vshra.s32 %v486, 16
        %v489 = vcvt.s32.f32 %v487
        %v490 = vcvt.s32.f32 %v488
        %491 = vmin.xlane.f32.xlu0 %v490
        %v492 = vpop.xlane.xlu0 %491
        %vm493 = vcmp.eq.f32.partialorder %v490, %v492
        %v494 = vsel %vm493, %v489, inf
        %495 = vmin.xlane.f32.xlu0 %v494
        %v496 = vpop.xlane.xlu0 %495
        %v497 = vcvt.f32.s32 %v496
        %v498 = vcvt.f32.s32 %v492
        %v499 = vshll.u32 %v498, 16
        %v500 = vadd.s32 %v499, %v497
        %vm501 = vcmp.eq.s32.totalorder %v370, %v500
        %vm502 = vcmp.eq.s32.totalorder %v387, %v500
        %v503 = vsel %vm501, -inf, %v473
        %v504 = vsel %vm502, -inf, %v474
        %vm505 = vcmp.eq.s32.totalorder %v370, 3
        %v506 = vsel %vm505, %v480, %v476
        %v507 = vadd.f32 %v477, %v480
        %v508 = vmax.f32 %v503, %v504
        %509 = vmax.xlane.f32.xlu0 %v508
        %v510 = vpop.xlane.xlu0 %509
        %vm511 = vcmp.eq.s32.totalorder %v370, 4
        %v512 = vsel %vm511, %v510, %v506
        %v513 = vadd.f32 %v507, %v510
        %514 = vst [vmem:[#allocation2] sm:$0xff] %v512
        %p515 = scmp.eq.s32.totalorder %s24, 2
        // Predicated region
        $region37: #{tpu_custom_call.1} parent=31 // pred_check
          %p516 = pneg %p515
        $region38: #{tpu_custom_call.1} parent=31 // pred_check_branch
          %518 = sbr.rel (%p516) target = $region40
        $region39: #{tpu_custom_call.1} parent=31 // pred_region
          %v519 = vld [vmem:[#allocation3] sm:$0xff]
          %v520 = vsub.f32 0.0, %v519
          %v521 = vmul.f32 %v513, 0.2
          %v522 = vadd.f32 %v520, %v521
          %523 = vst.msk [vmem:[%s256] sm:$0xff] %vm384, %v522
        $region40: #{tpu_custom_call.1} parent=31 // pred_fallthru
          _
        %s524 = sand.u32 %s119, 1
        %s525 = scalar_lea.sflag [#allocation5], %s524
        %s526 = sand.u32 %s119, 1
        %s527 = smul.addr %s526, 8
        %s528 = scalar_lea.vmem [#allocation4], %s527
        %p529 = scmp.lt.s32.totalorder %s23, 0
        %s530 = scalar_select %p529, %s23, 0
        %s531 = smul.addr %s530, 8
        %s532 = scalar_lea.vmem %s4, %s531
        // Predicated region
        $region41: #{tpu_custom_call.1} parent=31 // pred_check
          %p533 = pneg %p129
        $region42: #{tpu_custom_call.1} parent=31 // pred_check_branch
          %535 = sbr.rel (%p533) target = $region44
        $region43: #{tpu_custom_call.1} parent=31 // pred_region
          %537 = vsyncadd %s525, 0
          %s538 = smul.addr %s23, 3
          %s539 = sadd.s32 %s24, %s538
          %s540 = smul.addr %s539, 8
          %s541 = scalar_lea.hbm %s3, %s540
          %s543 = sshll.u32 %s528, 4
          %s544 = int_to_ptr.vmem [resolvable:$true] %s543
          %s545 = sshll.u32 %s541, 4
          %s546 = int_to_ptr.hbm [resolvable:$true] %s545
          %548 = dma.vmem_to_hbm [thread:$0]  %s544, 128, %s546, %s525
        $region44: #{tpu_custom_call.1} parent=31 // pred_fallthru
          _
        // Predicated region
        $region45: #{tpu_custom_call.1} parent=31 // pred_check
          %p549 = pneg %p155
        $region46: #{tpu_custom_call.1} parent=31 // pred_check_branch
          %551 = sbr.rel (%p549) target = $region48
        $region47: #{tpu_custom_call.1} parent=31 // pred_region
          _
        $region48: #{tpu_custom_call.1} parent=31 // pred_fallthru
          _
        // Predicated region
        $region49: #{tpu_custom_call.1} parent=31 // pred_check
          %p552 = pneg %p155
        $region50: #{tpu_custom_call.1} parent=31 // pred_check_branch
          %554 = sbr.rel (%p552) target = $region52
        $region51: #{tpu_custom_call.1} parent=31 // pred_region
          %p555 = scmp.lt.s32.totalorder %s23, 0
          %s556 = scalar_select %p555, %s23, 0
          %s557 = smul.addr %s556, 8
          %s558 = scalar_lea.vmem %s4, %s557
        $region52: #{tpu_custom_call.1} parent=31 // pred_fallthru
          _
      $region32: #{tpu_custom_call.1} parent=5 // pred_fallthru
        _
      %p559 = scmp.le.s32.totalorder 2, %s14
      // Predicated region
      $region53: #{tpu_custom_call.1} parent=5 // pred_check
        %p560 = pneg %p559
      $region54: #{tpu_custom_call.1} parent=5 // pred_check_branch
        %562 = sbr.rel (%p560) target = $region56
      $region55: #{tpu_custom_call.1} parent=5 // pred_region
        %s563 = ssub.s32 %s14, 2
        // Predicated region
        $region57: #{tpu_custom_call.1} parent=55 // pred_check
          %p564 = pneg %p135
        $region58: #{tpu_custom_call.1} parent=55 // pred_check_branch
          %566 = sbr.rel (%p564) target = $region60
        $region59: #{tpu_custom_call.1} parent=55 // pred_region
          %s567 = sand.u32 %s120, 1
          %s568 = scalar_lea.sflag [#allocation5], %s567
          %s569 = sand.u32 %s120, 1
          %s570 = smul.addr %s569, 8
          %s571 = scalar_lea.vmem [#allocation4], %s570
          %573 = dma.done %s568, 128
        $region60: #{tpu_custom_call.1} parent=55 // pred_fallthru
          _
      $region56: #{tpu_custom_call.1} parent=5 // pred_fallthru
        _
    $region6: #{tpu_custom_call.1} parent=1 // loop_footer
      %s18 = sadd.s32 1, %s14
    $region7: #{tpu_custom_call.1} parent=1 // loop_footer_branch
      %13 = sbr.rel target = $region3
    $region8: #{tpu_custom_call.1} parent=1 // loop_exit
      _
    %574 = vsyncpa [#allocation5], 1
    %s575 = scalar_lea.sflag [#allocation5], 1
    %576 = vsyncpa %s575, 1

</llo_original>
